<compile_context>
chip_gen: v6e
topology: v6e:2x2x1
jax: 0.10.0
libtpu: 0.0.40
codegen_flags: <defaults>
</compile_context>

<pallas_src>
import math
from functools import partial

import jax
import jax.numpy as jnp
import numpy as np
from jax import lax
from jax.experimental import pallas as pl
from jax.experimental.pallas import tpu as pltpu

# ---- ArcFace hyper-parameters (what models/head.cfg.yaml would provide) ----
ARC_S = 30.0
ARC_M = 0.50
EASY_MARGIN = False

_COS_M = math.cos(ARC_M)
_SIN_M = math.sin(ARC_M)
_TH = math.cos(math.pi - ARC_M)
_MM = math.sin(math.pi - ARC_M) * ARC_M

_NEG_BIG = -1e30  # finite "-inf" so the online max/exp never produces NaN


def _round_up(x, m):
    return (x + m - 1) // m * m


# --------------------------------------------------------------------------
# Prologue: L2-normalize the (C, D) class weights once, emit bf16.
# --------------------------------------------------------------------------
def _normalize_w_kernel(w_ref, wn_ref):
    w = w_ref[...].astype(jnp.float32)
    inv = lax.rsqrt(jnp.sum(w * w, axis=-1, keepdims=True) + 1e-12)
    wn_ref[...] = (w * inv).astype(wn_ref.dtype)


# --------------------------------------------------------------------------
# Main kernel: one (batch tile, class tile) grid step of ArcFace + streaming CE.
# --------------------------------------------------------------------------
def _arcface_ce_kernel(x_ref, wn_ref, labels_ref, out_ref,
                       xn_sc, m_sc, l_sc, tgt_sc,
                       *, num_classes, c_tile):
    ci = pl.program_id(1)
    n_c = pl.num_programs(1)

    # Per-batch-tile init: normalize x once (stored bf16), reset LSE accumulators.
    @pl.when(ci == 0)
    def _init():
        x = x_ref[...].astype(jnp.float32)
        inv = lax.rsqrt(jnp.sum(x * x, axis=-1, keepdims=True) + 1e-12)
        xn_sc[...] = (x * inv).astype(xn_sc.dtype)
        m_sc[...] = jnp.full_like(m_sc, _NEG_BIG)
        l_sc[...] = jnp.zeros_like(l_sc)
        tgt_sc[...] = jnp.zeros_like(tgt_sc)

    labels = labels_ref[...]                      # (B_T, 1) int32
    c_start = ci * c_tile

    # Cosine similarity on the MXU: bf16 inputs, f32 accumulate, no transpose
    # (contract dim 1 of both (B_T, D) and (C_T, D)).
    cosine = lax.dot_general(
        xn_sc[...], wn_ref[...],
        dimension_numbers=(((1,), (1,)), ((), ())),
        preferred_element_type=jnp.float32,
    )                                             # (B_T, C_T) f32

    col = c_start + lax.broadcasted_iota(jnp.int32, cosine.shape, 1)
    one_hot = col == labels                       # (B_T, C_T) bool

    # ArcFace margin only on the target column (a (B_T, 1) vector).
    tgt_cos = jnp.sum(jnp.where(one_hot, cosine, 0.0), axis=-1, keepdims=True)
    sine = jnp.sqrt(jnp.clip(1.0 - tgt_cos * tgt_cos, 0.0, 1.0))
    phi = tgt_cos * _COS_M - sine * _SIN_M
    if EASY_MARGIN:
        phi = jnp.where(tgt_cos > 0.0, phi, tgt_cos)
    else:
        phi = jnp.where(tgt_cos > _TH, phi, tgt_cos - _MM)

    logits = jnp.where(one_hot, phi, cosine) * ARC_S
    if num_classes % c_tile != 0:
        # Mask padded class columns (only exist when C was padded up to a tile multiple).
        logits = jnp.where(col < num_classes, logits, _NEG_BIG)

    # Accumulate the target logit (each row's label lives in exactly one class tile).
    in_tile = (labels >= c_start) & (labels < c_start + c_tile)
    tgt_sc[...] += jnp.where(in_tile, phi * ARC_S, 0.0)

    # Online logsumexp update.
    tile_max = jnp.max(logits, axis=-1, keepdims=True)
    m_new = jnp.maximum(m_sc[...], tile_max)
    l_sc[...] = l_sc[...] * jnp.exp(m_sc[...] - m_new) + jnp.sum(
        jnp.exp(logits - m_new), axis=-1, keepdims=True)
    m_sc[...] = m_new

    @pl.when(ci == n_c - 1)
    def _finalize():
        out_ref[...] = (m_sc[...] + jnp.log(l_sc[...])) - tgt_sc[...]


# --------------------------------------------------------------------------
# Wrapper
# --------------------------------------------------------------------------
def head_and_loss_arcface(deep_features, weight, labels, *, b_tile=128, c_tile=2048):
    """ArcFace head + mean cross-entropy loss. Returns a scalar f32."""
    B, D = deep_features.shape
    C, D2 = weight.shape
    assert D == D2

    B_T = min(b_tile, _round_up(B, 8))
    B_pad = _round_up(B, B_T)
    C_T = min(c_tile, _round_up(C, 128))
    C_pad = _round_up(C, C_T)
    n_b = B_pad // B_T
    n_c = C_pad // C_T

    x = deep_features
    labels_2d = labels.astype(jnp.int32).reshape(B, 1)
    if B_pad != B:
        x = jnp.pad(x, ((0, B_pad - B), (0, 0)))
        labels_2d = jnp.pad(labels_2d, ((0, B_pad - B), (0, 0)))
    w = weight
    if C_pad != C:
        w = jnp.pad(w, ((0, C_pad - C), (0, 0)))

    # Prologue: normalize class weights once -> bf16 (halves HBM read in the main kernel).
    w_norm = pl.pallas_call(
        _normalize_w_kernel,
        out_shape=jax.ShapeDtypeStruct((C_pad, D), jnp.bfloat16),
        grid=(n_c,),
        in_specs=[pl.BlockSpec((C_T, D), lambda i: (i, 0))],
        out_specs=pl.BlockSpec((C_T, D), lambda i: (i, 0)),
        compiler_params=pltpu.CompilerParams(dimension_semantics=("parallel",)),
    )(w)

    # VMEM budget sized to the chosen tiles (double-buffered inputs + intermediates + scratch).
    d_lanes = _round_up(D, 128)
    est = (
        2 * C_T * d_lanes * 2        # double-buffered bf16 weight tile
        + 2 * B_T * d_lanes * 4      # double-buffered f32 x tile
        + B_T * d_lanes * 2          # normalized-x scratch (bf16)
        + 6 * B_T * C_T * 4          # (B_T, C_T) f32 intermediates
        + 8 * B_T * 128 * 4          # small (B_T, 1) scratch / labels / output (lane-padded)
    )
    vmem_limit = int(min(max(3 * est, 8 << 20), 32 << 20))

    kernel = partial(_arcface_ce_kernel, num_classes=C, c_tile=C_T)
    per_example = pl.pallas_call(
        kernel,
        out_shape=jax.ShapeDtypeStruct((B_pad, 1), jnp.float32),
        grid_spec=pltpu.PrefetchScalarGridSpec(
            num_scalar_prefetch=0,
            grid=(n_b, n_c),
            in_specs=[
                pl.BlockSpec((B_T, D), lambda bi, ci: (bi, 0)),   # x (stays resident over ci)
                pl.BlockSpec((C_T, D), lambda bi, ci: (ci, 0)),   # normalized bf16 weights
                pl.BlockSpec((B_T, 1), lambda bi, ci: (bi, 0)),   # labels
            ],
            out_specs=pl.BlockSpec((B_T, 1), lambda bi, ci: (bi, 0)),
            scratch_shapes=[
                pltpu.VMEM((B_T, D), jnp.bfloat16),   # normalized x
                pltpu.VMEM((B_T, 1), jnp.float32),    # running max
                pltpu.VMEM((B_T, 1), jnp.float32),    # running sum-exp
                pltpu.VMEM((B_T, 1), jnp.float32),    # target logit
            ],
        ),
        compiler_params=pltpu.CompilerParams(
            dimension_semantics=("parallel", "arbitrary"),
            vmem_limit_bytes=vmem_limit,
        ),
    )(x, w_norm, labels_2d)

    # Mean over the real batch (tiny XLA reduce; padded rows are sliced off).
    return jnp.sum(per_example[:B, 0]) * (1.0 / B)


# --------------------------------------------------------------------------
# Pure-JAX reference (matches the PyTorch ArcMarginProduct + CrossEntropyLoss path)
# --------------------------------------------------------------------------
def _reference(deep_features, weight, labels):
    x_n = deep_features / jnp.linalg.norm(deep_features, axis=-1, keepdims=True)
    w_n = weight / jnp.linalg.norm(weight, axis=-1, keepdims=True)
    cosine = jnp.dot(x_n, w_n.T, precision=jax.lax.Precision.HIGHEST)
    sine = jnp.sqrt(jnp.clip(1.0 - cosine * cosine, 0.0, 1.0))
    phi = cosine * _COS_M - sine * _SIN_M
    phi = jnp.where(cosine > _TH, phi, cosine - _MM)
    one_hot = jax.nn.one_hot(labels, weight.shape[0], dtype=cosine.dtype)
    logits = (one_hot * phi + (1.0 - one_hot) * cosine) * ARC_S
    logp = jax.nn.log_softmax(logits, axis=-1)
    return -jnp.mean(jnp.sum(one_hot * logp, axis=-1))


if __name__ == "__main__":
    B, D, C = 8, 32, 128  # batch, in_feature, num_classes

    key = jax.random.PRNGKey(0)
    k_x, k_w, k_y = jax.random.split(key, 3)
    deep_features = jax.random.normal(k_x, (B, D), dtype=jnp.float32)
    # ArcMarginProduct weight: (num_classes, in_feature), xavier-ish init.
    weight = jax.random.normal(k_w, (C, D), dtype=jnp.float32) * (1.0 / math.sqrt(D))
    labels = jax.random.randint(k_y, (B,), 0, C, dtype=jnp.int32)

    loss = jax.block_until_ready(head_and_loss_arcface(deep_features, weight, labels))
    ref = jax.block_until_ready(_reference(deep_features, weight, labels))
    np.testing.assert_allclose(np.asarray(loss), np.asarray(ref), rtol=2e-2, atol=2e-2)
    print("KERNEL_OK")
</pallas_src>

<mosaic_0001>
module attributes {stable_mosaic.version = 11 : i64} {
  func.func @_normalize_w_kernel(%arg0: i32, %arg1: memref<128x32xf32, #tpu.memory_space<vmem>>, %arg2: memref<128x32xbf16, #tpu.memory_space<vmem>>) attributes {dimension_semantics = [#tpu.dimension_semantics<parallel>], iteration_bounds = array<i64: 1>, scalar_prefetch = 0 : i64, scratch_operands = 0 : i64, tpu.core_type = #tpu.core_type<tc>, window_params = [{transform_indices = @transform_0, window_bounds = array<i64: 128, 32>}, {transform_indices = @transform_1, window_bounds = array<i64: 128, 32>}]} {
    %c0 = arith.constant 0 : index
    %c0_0 = arith.constant 0 : index
    %0 = vector.load %arg1[%c0, %c0_0] : memref<128x32xf32, #tpu.memory_space<vmem>>, vector<128x32xf32>
    %1 = arith.mulf %0, %0 : vector<128x32xf32>
    %cst = arith.constant dense<0.000000e+00> : vector<128xf32>
    %2 = vector.multi_reduction <add>, %1, %cst [1] : vector<128x32xf32> to vector<128xf32>
    %3 = vector.shape_cast %2 : vector<128xf32> to vector<128x1xf32>
    %cst_1 = arith.constant 9.99999996E-13 : f32
    %4 = vector.broadcast %cst_1 : f32 to vector<128x1xf32>
    %5 = arith.addf %3, %4 : vector<128x1xf32>
    %6 = math.rsqrt %5 : vector<128x1xf32>
    %7 = vector.broadcast %6 : vector<128x1xf32> to vector<128x32xf32>
    %8 = arith.mulf %0, %7 : vector<128x32xf32>
    %9 = arith.truncf %8 : vector<128x32xf32> to vector<128x32xbf16>
    %c0_2 = arith.constant 0 : index
    %c0_3 = arith.constant 0 : index
    %10 = vector.load %arg2[%c0_2, %c0_3] : memref<128x32xbf16, #tpu.memory_space<vmem>>, vector<128x32xbf16>
    tpu.vector_store %arg2[%c0_2, %c0_3], %9 {strides = array<i32>} : memref<128x32xbf16, #tpu.memory_space<vmem>>, vector<128x32xbf16>,
    return
  }
  func.func @transform_0(%arg0: i32) -> (i32, i32) {
    %c0_i32 = arith.constant 0 : i32
    %c0_i32_0 = arith.constant 0 : i32
    return %arg0, %c0_i32 : i32, i32
  }
  func.func @transform_1(%arg0: i32) -> (i32, i32) {
    %c0_i32 = arith.constant 0 : i32
    %c0_i32_0 = arith.constant 0 : i32
    return %arg0, %c0_i32 : i32, i32
  }
}

</mosaic_0001>

<llo_original>
// kernel: tpu_custom_call.1
$region0: #{tpu_custom_call.1}
  #allocation0 [shape = 'u32[]', space=smem, size = 0x4, offset = 0x4, fixed_abs, tag = 'smem constant byte address 0x4 - core index']
  #allocation1 [shape = 'u32[144,128]{1,0:T(1,128)}', space=vmem, size = 0x12000, scoped, tag = 'internal scratch']
  %s0 = inlined_call_operand.vmem [shape: f32[128,32], index: 0, kind: input, shape index: {}]
  %s1 = inlined_call_operand.vmem [shape: bf16[128,32], index: 1, kind: output, shape index: {}]
  %s2 = sld [smem:[#allocation0]]
  $region14: #{tpu_custom_call.1} parent=0
    _
  %s4 = ssub.s32 1, %s2
  %s5 = scalar_select 0, %s4, %s2
  // Predicated region
  $region2: #{tpu_custom_call.1} parent=0 // pred_check
    _
  $region3: #{tpu_custom_call.1} parent=0 // pred_check_branch
    %7 = sbr.rel (0) target = $region5
  $region4: #{tpu_custom_call.1} parent=0 // pred_region
    _
  $region5: #{tpu_custom_call.1} parent=0 // pred_fallthru
    _
  %v8 = vld [vmem:[%s0] sm:$0xff]
  %v9 = vld [vmem:[%s0 + $0x8] sm:$0xff]
  %v10 = vld [vmem:[%s0 + $0x10] sm:$0xff]
  %v11 = vld [vmem:[%s0 + $0x18] sm:$0xff]
  %v12 = vld [vmem:[%s0 + $0x20] sm:$0xff]
  %v13 = vld [vmem:[%s0 + $0x28] sm:$0xff]
  %v14 = vld [vmem:[%s0 + $0x30] sm:$0xff]
  %v15 = vld [vmem:[%s0 + $0x38] sm:$0xff]
  %v16 = vld [vmem:[%s0 + $0x40] sm:$0xff]
  %v17 = vld [vmem:[%s0 + $0x48] sm:$0xff]
  %v18 = vld [vmem:[%s0 + $0x50] sm:$0xff]
  %v19 = vld [vmem:[%s0 + $0x58] sm:$0xff]
  %v20 = vld [vmem:[%s0 + $0x60] sm:$0xff]
  %v21 = vld [vmem:[%s0 + $0x68] sm:$0xff]
  %v22 = vld [vmem:[%s0 + $0x70] sm:$0xff]
  %v23 = vld [vmem:[%s0 + $0x78] sm:$0xff]
  %v24 = vmul.f32 %v8, %v8
  %v25 = vmul.f32 %v9, %v9
  %v26 = vmul.f32 %v10, %v10
  %v27 = vmul.f32 %v11, %v11
  %v28 = vmul.f32 %v12, %v12
  %v29 = vmul.f32 %v13, %v13
  %v30 = vmul.f32 %v14, %v14
  %v31 = vmul.f32 %v15, %v15
  %v32 = vmul.f32 %v16, %v16
  %v33 = vmul.f32 %v17, %v17
  %v34 = vmul.f32 %v18, %v18
  %v35 = vmul.f32 %v19, %v19
  %v36 = vmul.f32 %v20, %v20
  %v37 = vmul.f32 %v21, %v21
  %v38 = vmul.f32 %v22, %v22
  %v39 = vmul.f32 %v23, %v23
  %vm40 = vcmask 261120
  %v41 = vsel %vm40, %v24, 0.0
  %42 = vadd.xlane.f32.xlu0 %v41
  %v43 = vpop.xlane.xlu0 %42
  %v44 = vsel %vm40, %v25, 0.0
  %45 = vadd.xlane.f32.xlu0 %v44
  %v46 = vpop.xlane.xlu0 %45
  %v47 = vsel %vm40, %v26, 0.0
  %48 = vadd.xlane.f32.xlu0 %v47
  %v49 = vpop.xlane.xlu0 %48
  %v50 = vsel %vm40, %v27, 0.0
  %51 = vadd.xlane.f32.xlu0 %v50
  %v52 = vpop.xlane.xlu0 %51
  %v53 = vsel %vm40, %v28, 0.0
  %54 = vadd.xlane.f32.xlu0 %v53
  %v55 = vpop.xlane.xlu0 %54
  %v56 = vsel %vm40, %v29, 0.0
  %57 = vadd.xlane.f32.xlu0 %v56
  %v58 = vpop.xlane.xlu0 %57
  %v59 = vsel %vm40, %v30, 0.0
  %60 = vadd.xlane.f32.xlu0 %v59
  %v61 = vpop.xlane.xlu0 %60
  %v62 = vsel %vm40, %v31, 0.0
  %63 = vadd.xlane.f32.xlu0 %v62
  %v64 = vpop.xlane.xlu0 %63
  %v65 = vsel %vm40, %v32, 0.0
  %66 = vadd.xlane.f32.xlu0 %v65
  %v67 = vpop.xlane.xlu0 %66
  %v68 = vsel %vm40, %v33, 0.0
  %69 = vadd.xlane.f32.xlu0 %v68
  %v70 = vpop.xlane.xlu0 %69
  %v71 = vsel %vm40, %v34, 0.0
  %72 = vadd.xlane.f32.xlu0 %v71
  %v73 = vpop.xlane.xlu0 %72
  %v74 = vsel %vm40, %v35, 0.0
  %75 = vadd.xlane.f32.xlu0 %v74
  %v76 = vpop.xlane.xlu0 %75
  %v77 = vsel %vm40, %v36, 0.0
  %78 = vadd.xlane.f32.xlu0 %v77
  %v79 = vpop.xlane.xlu0 %78
  %v80 = vsel %vm40, %v37, 0.0
  %81 = vadd.xlane.f32.xlu0 %v80
  %v82 = vpop.xlane.xlu0 %81
  %v83 = vsel %vm40, %v38, 0.0
  %84 = vadd.xlane.f32.xlu0 %v83
  %v85 = vpop.xlane.xlu0 %84
  %v86 = vsel %vm40, %v39, 0.0
  %87 = vadd.xlane.f32.xlu0 %v86
  %v88 = vpop.xlane.xlu0 %87
  %v89 = vadd.f32 %v43, 1e-12
  %v90 = vadd.f32 %v46, 1e-12
  %v91 = vadd.f32 %v49, 1e-12
  %v92 = vadd.f32 %v52, 1e-12
  %v93 = vadd.f32 %v55, 1e-12
  %v94 = vadd.f32 %v58, 1e-12
  %v95 = vadd.f32 %v61, 1e-12
  %v96 = vadd.f32 %v64, 1e-12
  %v97 = vadd.f32 %v67, 1e-12
  %v98 = vadd.f32 %v70, 1e-12
  %v99 = vadd.f32 %v73, 1e-12
  %v100 = vadd.f32 %v76, 1e-12
  %v101 = vadd.f32 %v79, 1e-12
  %v102 = vadd.f32 %v82, 1e-12
  %v103 = vadd.f32 %v85, 1e-12
  %v104 = vadd.f32 %v88, 1e-12
  %v105 = vrsqrt.pop %v89
  %v106 = vrsqrt.pop %v90
  %v107 = vrsqrt.pop %v91
  %v108 = vrsqrt.pop %v92
  %v109 = vrsqrt.pop %v93
  %v110 = vrsqrt.pop %v94
  %v111 = vrsqrt.pop %v95
  %v112 = vrsqrt.pop %v96
  %v113 = vrsqrt.pop %v97
  %v114 = vrsqrt.pop %v98
  %v115 = vrsqrt.pop %v99
  %v116 = vrsqrt.pop %v100
  %v117 = vrsqrt.pop %v101
  %v118 = vrsqrt.pop %v102
  %v119 = vrsqrt.pop %v103
  %v120 = vrsqrt.pop %v104
  %v121 = vmul.f32 %v8, %v105
  %v122 = vmul.f32 %v9, %v106
  %v123 = vmul.f32 %v10, %v107
  %v124 = vmul.f32 %v11, %v108
  %v125 = vmul.f32 %v12, %v109
  %v126 = vmul.f32 %v13, %v110
  %v127 = vmul.f32 %v14, %v111
  %v128 = vmul.f32 %v15, %v112
  %v129 = vmul.f32 %v16, %v113
  %v130 = vmul.f32 %v17, %v114
  %v131 = vmul.f32 %v18, %v115
  %v132 = vmul.f32 %v19, %v116
  %v133 = vmul.f32 %v20, %v117
  %v134 = vmul.f32 %v21, %v118
  %v135 = vmul.f32 %v22, %v119
  %v136 = vmul.f32 %v23, %v120
  %v137 = vpack.c.bf16 %v122, %v121
  %v138 = vpack.c.bf16 %v124, %v123
  %v139 = vpack.c.bf16 %v126, %v125
  %v140 = vpack.c.bf16 %v128, %v127
  %v141 = vpack.c.bf16 %v130, %v129
  %v142 = vpack.c.bf16 %v132, %v131
  %v143 = vpack.c.bf16 %v134, %v133
  %v144 = vpack.c.bf16 %v136, %v135
  %v153 = vunpack.c.l.b16 %v137
  %v154 = vunpack.c.h.b16 %v137
  %v155 = vunpack.c.l.b16 %v138
  %v156 = vunpack.c.h.b16 %v138
  %v157 = vunpack.c.l.b16 %v139
  %v158 = vunpack.c.h.b16 %v139
  %v159 = vunpack.c.l.b16 %v140
  %v160 = vunpack.c.h.b16 %v140
  %v161 = vunpack.c.l.b16 %v141
  %v162 = vunpack.c.h.b16 %v141
  %v163 = vunpack.c.l.b16 %v142
  %v164 = vunpack.c.h.b16 %v142
  %v165 = vunpack.c.l.b16 %v143
  %v166 = vunpack.c.h.b16 %v143
  %v167 = vunpack.c.l.b16 %v144
  %v168 = vunpack.c.h.b16 %v144
  %v169 = vpack.c.b16 %v153, %v153
  %v170 = vpack.c.b16 %v154, %v154
  %v171 = vpack.c.b16 %v155, %v155
  %v172 = vpack.c.b16 %v156, %v156
  %v173 = vpack.c.b16 %v157, %v157
  %v174 = vpack.c.b16 %v158, %v158
  %v175 = vpack.c.b16 %v159, %v159
  %v176 = vpack.c.b16 %v160, %v160
  %v177 = vpack.c.b16 %v161, %v161
  %v178 = vpack.c.b16 %v162, %v162
  %v179 = vpack.c.b16 %v163, %v163
  %v180 = vpack.c.b16 %v164, %v164
  %v181 = vpack.c.b16 %v165, %v165
  %v182 = vpack.c.b16 %v166, %v166
  %v183 = vpack.c.b16 %v167, %v167
  %v184 = vpack.c.b16 %v168, %v168
  %vm201 = vcmask 257024
  %202 = vst.msk [vmem:[%s1] sm:$0xf] %vm201, %v169
  %203 = vst.msk [vmem:[%s1 + $0x4] sm:$0xf] %vm201, %v170
  %204 = vst.msk [vmem:[%s1 + $0x8] sm:$0xf] %vm201, %v171
  %205 = vst.msk [vmem:[%s1 + $0xc] sm:$0xf] %vm201, %v172
  %206 = vst.msk [vmem:[%s1 + $0x10] sm:$0xf] %vm201, %v173
  %207 = vst.msk [vmem:[%s1 + $0x14] sm:$0xf] %vm201, %v174
  %208 = vst.msk [vmem:[%s1 + $0x18] sm:$0xf] %vm201, %v175
  %209 = vst.msk [vmem:[%s1 + $0x1c] sm:$0xf] %vm201, %v176
  %210 = vst.msk [vmem:[%s1 + $0x20] sm:$0xf] %vm201, %v177
  %211 = vst.msk [vmem:[%s1 + $0x24] sm:$0xf] %vm201, %v178
  %212 = vst.msk [vmem:[%s1 + $0x28] sm:$0xf] %vm201, %v179
  %213 = vst.msk [vmem:[%s1 + $0x2c] sm:$0xf] %vm201, %v180
  %214 = vst.msk [vmem:[%s1 + $0x30] sm:$0xf] %vm201, %v181
  %215 = vst.msk [vmem:[%s1 + $0x34] sm:$0xf] %vm201, %v182
  %216 = vst.msk [vmem:[%s1 + $0x38] sm:$0xf] %vm201, %v183
  %217 = vst.msk [vmem:[%s1 + $0x3c] sm:$0xf] %vm201, %v184
  // Predicated region
  $region6: #{tpu_custom_call.1} parent=0 // pred_check
    _
  $region7: #{tpu_custom_call.1} parent=0 // pred_check_branch
    %219 = sbr.rel (0) target = $region9
  $region8: #{tpu_custom_call.1} parent=0 // pred_region
    _
  $region9: #{tpu_custom_call.1} parent=0 // pred_fallthru
    _
  // Predicated region
  $region10: #{tpu_custom_call.1} parent=0 // pred_check
    _
  $region11: #{tpu_custom_call.1} parent=0 // pred_check_branch
    %221 = sbr.rel (0) target = $region13
  $region12: #{tpu_custom_call.1} parent=0 // pred_region
    _
  $region13: #{tpu_custom_call.1} parent=0 // pred_fallthru
    _

</llo_original>
